<compile_context>
chip_gen: v7x
topology: tpu7x:2x2x1
jax: 0.10.0
libtpu: 0.0.40
codegen_flags: <defaults>
</compile_context>

<pallas_src>
import functools

import jax
import jax.numpy as jnp
from jax.experimental import pallas as pl
from jax.experimental.pallas import tpu as pltpu


def _round_up(x, m):
    return ((x + m - 1) // m) * m


def _discriminator_kernel(x_ref, w1_ref, b1_ref, w2_ref, b2_ref, w3_ref, b3_ref,
                          o_ref, *, scale, compute_dtype):
    # fc1 + relu: cast the f32 x tile to the matmul dtype in VMEM (VPU op),
    # MXU accumulates in f32; bias add / relu / tanh / scale stay f32
    # (safe on v5e, which has no bf16 VPU/EUP).
    h1 = jnp.dot(x_ref[...].astype(compute_dtype), w1_ref[...],
                 preferred_element_type=jnp.float32)
    h1 = jnp.maximum(h1 + b1_ref[...], 0.0)
    # fc2 + relu
    h2 = jnp.dot(h1.astype(compute_dtype), w2_ref[...],
                 preferred_element_type=jnp.float32)
    h2 = jnp.maximum(h2 + b2_ref[...], 0.0)
    # fc3 + scaled tanh (narrow N=num_output output; store is bounded/masked)
    logits = jnp.dot(h2.astype(compute_dtype), w3_ref[...],
                     preferred_element_type=jnp.float32)
    o_ref[...] = (scale * jnp.tanh(logits + b3_ref[...])).astype(o_ref.dtype)


def prepare_params(params, *, use_bf16=True):
    """One-time parameter prep (hoisted out of the per-call path).

    Casts weights to the matmul compute dtype (bf16 fast path or f32) and
    biases to f32.  Call this once when parameters are created/loaded and
    reuse the result for every discriminator_forward call.
    """
    cdt = jnp.bfloat16 if use_bf16 else jnp.float32
    return {
        "w1": params["w1"].astype(cdt), "b1": params["b1"].astype(jnp.float32),
        "w2": params["w2"].astype(cdt), "b2": params["b2"].astype(jnp.float32),
        "w3": params["w3"].astype(cdt), "b3": params["b3"].astype(jnp.float32),
    }


def discriminator_forward(x, prepared, *, scale=2.0, batch_tile=1024):
    """Fused 3-layer Discriminator MLP as a single Pallas TPU kernel.

    x: [B, num_input] float32 (not pre-cast; the kernel casts in VMEM)
    prepared: output of prepare_params(); weights [in, out], biases [1, out]
    returns: [B, num_output] float32
    """
    # TODO(synk): dropout=True path (nn.Dropout p=0.2) not implemented; this
    # kernel covers the default dropout=False forward pass.
    B, num_input = x.shape
    w1, b1 = prepared["w1"], prepared["b1"]
    w2, b2 = prepared["w2"], prepared["b2"]
    w3, b3 = prepared["w3"], prepared["b3"]
    num_hidden = w1.shape[1]
    num_output = w3.shape[1]
    compute_dtype = w1.dtype

    # Batch tiling:
    #  * split the batch so the grid has >=2 steps whenever B >= 8 (lets the
    #    "parallel" axis shard across v7x's two TensorCores; harmless on
    #    v5e/v6e),
    #  * cap the tile at batch_tile (1024) so large batches still amortize
    #    per-step overhead without blowing up VMEM,
    #  * ragged tails handled by the cdiv grid (edge blocks are masked on the
    #    output store) -- no jnp.pad pass over x.
    if B < 8:
        tile = B                      # block dim == full dim (always legal)
    else:
        tile = min(batch_tile, _round_up(pl.cdiv(B, 2), 8))
    grid = (pl.cdiv(B, tile),)

    resident = lambda shape: pl.BlockSpec(shape, lambda i: (0, 0))
    kernel = functools.partial(_discriminator_kernel,
                               scale=float(scale),
                               compute_dtype=compute_dtype)

    return pl.pallas_call(
        kernel,
        out_shape=jax.ShapeDtypeStruct((B, num_output), jnp.float32),
        grid_spec=pltpu.PrefetchScalarGridSpec(
            num_scalar_prefetch=0,
            grid=grid,
            in_specs=[
                pl.BlockSpec((tile, num_input), lambda i: (i, 0)),  # x tile (f32)
                resident((num_input, num_hidden)),    # w1 (VMEM-resident)
                resident((1, num_hidden)),            # b1
                resident((num_hidden, num_hidden)),   # w2
                resident((1, num_hidden)),            # b2
                resident((num_hidden, num_output)),   # w3 (narrow, unpadded)
                resident((1, num_output)),            # b3
            ],
            out_specs=pl.BlockSpec((tile, num_output), lambda i: (i, 0)),
        ),
        compiler_params=pltpu.CompilerParams(
            dimension_semantics=("parallel",)),
    )(x, w1, b1, w2, b2, w3, b3)


def init_params(key, num_input, num_hidden, num_output):
    """Deterministic parameter init (uniform, PyTorch-Linear-style bounds)."""
    ks = jax.random.split(key, 6)

    def linear(kw, kb, fan_in, fan_out):
        bound = 1.0 / jnp.sqrt(jnp.float32(fan_in))
        w = jax.random.uniform(kw, (fan_in, fan_out), jnp.float32, -bound, bound)
        b = jax.random.uniform(kb, (1, fan_out), jnp.float32, -bound, bound)
        return w, b

    w1, b1 = linear(ks[0], ks[1], num_input, num_hidden)
    w2, b2 = linear(ks[2], ks[3], num_hidden, num_hidden)
    w3, b3 = linear(ks[4], ks[5], num_hidden, num_output)
    return {"w1": w1, "b1": b1, "w2": w2, "b2": b2, "w3": w3, "b3": b3}


def reference_forward(x, params, scale=2.0):
    h1 = jnp.maximum(x @ params["w1"] + params["b1"], 0.0)
    h2 = jnp.maximum(h1 @ params["w2"] + params["b2"], 0.0)
    return scale * jnp.tanh(h2 @ params["w3"] + params["b3"])


if __name__ == "__main__":
    key = jax.random.PRNGKey(0)
    k_x, k_p = jax.random.split(key)

    batch = 64
    num_input = 32
    num_hidden = 32
    num_output = 2
    scale = 2.0

    x = jax.random.normal(k_x, (batch, num_input), jnp.float32)
    params = init_params(k_p, num_input, num_hidden, num_output)
    ref = reference_forward(x, params, scale=scale)

    # bf16-matmul path (default; v6e/v7x fast path) -- loose tolerance.
    # prepare_params is called ONCE; forward launches a single pallas_call.
    prep_bf16 = prepare_params(params, use_bf16=True)
    out_bf16 = jax.block_until_ready(
        discriminator_forward(x, prep_bf16, scale=scale))
    assert out_bf16.shape == (batch, num_output)
    assert jnp.allclose(out_bf16, ref, atol=3e-2, rtol=3e-2), "bf16 mismatch"

    # f32 path -- tight tolerance; ragged batch exercises cdiv-grid edge masking.
    prep_f32 = prepare_params(params, use_bf16=False)
    x_ragged = x[:50]
    out_f32 = jax.block_until_ready(
        discriminator_forward(x_ragged, prep_f32, scale=scale))
    assert out_f32.shape == (50, num_output)
    assert jnp.allclose(out_f32, ref[:50], atol=1e-5, rtol=1e-5), "f32 mismatch"

    print("KERNEL_OK")
</pallas_src>

<mosaic_0001>
module attributes {stable_mosaic.version = 11 : i64} {
  func.func @_discriminator_kernel(%arg0: i32, %arg1: memref<32x32xf32, #tpu.memory_space<vmem>>, %arg2: memref<32x32xbf16, #tpu.memory_space<vmem>>, %arg3: memref<1x32xf32, #tpu.memory_space<vmem>>, %arg4: memref<32x32xbf16, #tpu.memory_space<vmem>>, %arg5: memref<1x32xf32, #tpu.memory_space<vmem>>, %arg6: memref<32x2xbf16, #tpu.memory_space<vmem>>, %arg7: memref<1x2xf32, #tpu.memory_space<vmem>>, %arg8: memref<32x2xf32, #tpu.memory_space<vmem>>) attributes {dimension_semantics = [#tpu.dimension_semantics<parallel>], iteration_bounds = array<i64: 2>, scalar_prefetch = 0 : i64, scratch_operands = 0 : i64, tpu.core_type = #tpu.core_type<tc>, window_params = [{transform_indices = @transform_0, window_bounds = array<i64: 32, 32>}, {pipeline_mode = #tpu.pipeline_mode<synchronous>, transform_indices = @transform_1, window_bounds = array<i64: 32, 32>}, {pipeline_mode = #tpu.pipeline_mode<synchronous>, transform_indices = @transform_2, window_bounds = array<i64: 1, 32>}, {pipeline_mode = #tpu.pipeline_mode<synchronous>, transform_indices = @transform_3, window_bounds = array<i64: 32, 32>}, {pipeline_mode = #tpu.pipeline_mode<synchronous>, transform_indices = @transform_4, window_bounds = array<i64: 1, 32>}, {pipeline_mode = #tpu.pipeline_mode<synchronous>, transform_indices = @transform_5, window_bounds = array<i64: 32, 2>}, {pipeline_mode = #tpu.pipeline_mode<synchronous>, transform_indices = @transform_6, window_bounds = array<i64: 1, 2>}, {transform_indices = @transform_7, window_bounds = array<i64: 32, 2>}]} {
    %c0 = arith.constant 0 : index
    %c0_0 = arith.constant 0 : index
    %0 = vector.load %arg1[%c0, %c0_0] : memref<32x32xf32, #tpu.memory_space<vmem>>, vector<32x32xf32>
    %1 = arith.truncf %0 : vector<32x32xf32> to vector<32x32xbf16>
    %c0_1 = arith.constant 0 : index
    %c0_2 = arith.constant 0 : index
    %2 = vector.load %arg2[%c0_1, %c0_2] : memref<32x32xbf16, #tpu.memory_space<vmem>>, vector<32x32xbf16>
    %cst = arith.constant dense<0.000000e+00> : vector<32x32xf32>
    %3 = tpu.matmul %1, %2, %cst {dimension_numbers = #tpu.dot_dimension_numbers<[1], [0], [0], [1], [0, 0, 1, 1], [], []>} : vector<32x32xbf16>, vector<32x32xbf16>, vector<32x32xf32> -> vector<32x32xf32>
    %c0_3 = arith.constant 0 : index
    %c0_4 = arith.constant 0 : index
    %4 = vector.load %arg3[%c0_3, %c0_4] : memref<1x32xf32, #tpu.memory_space<vmem>>, vector<1x32xf32>
    %5 = vector.broadcast %4 : vector<1x32xf32> to vector<32x32xf32>
    %6 = arith.addf %3, %5 : vector<32x32xf32>
    %cst_5 = arith.constant 0.000000e+00 : f32
    %7 = vector.broadcast %cst_5 : f32 to vector<32x32xf32>
    %8 = arith.maximumf %6, %7 : vector<32x32xf32>
    %9 = arith.truncf %8 : vector<32x32xf32> to vector<32x32xbf16>
    %c0_6 = arith.constant 0 : index
    %c0_7 = arith.constant 0 : index
    %10 = vector.load %arg4[%c0_6, %c0_7] : memref<32x32xbf16, #tpu.memory_space<vmem>>, vector<32x32xbf16>
    %cst_8 = arith.constant dense<0.000000e+00> : vector<32x32xf32>
    %11 = tpu.matmul %9, %10, %cst_8 {dimension_numbers = #tpu.dot_dimension_numbers<[1], [0], [0], [1], [0, 0, 1, 1], [], []>} : vector<32x32xbf16>, vector<32x32xbf16>, vector<32x32xf32> -> vector<32x32xf32>
    %c0_9 = arith.constant 0 : index
    %c0_10 = arith.constant 0 : index
    %12 = vector.load %arg5[%c0_9, %c0_10] : memref<1x32xf32, #tpu.memory_space<vmem>>, vector<1x32xf32>
    %13 = vector.broadcast %12 : vector<1x32xf32> to vector<32x32xf32>
    %14 = arith.addf %11, %13 : vector<32x32xf32>
    %cst_11 = arith.constant 0.000000e+00 : f32
    %15 = vector.broadcast %cst_11 : f32 to vector<32x32xf32>
    %16 = arith.maximumf %14, %15 : vector<32x32xf32>
    %17 = arith.truncf %16 : vector<32x32xf32> to vector<32x32xbf16>
    %c0_12 = arith.constant 0 : index
    %c0_13 = arith.constant 0 : index
    %18 = vector.load %arg6[%c0_12, %c0_13] : memref<32x2xbf16, #tpu.memory_space<vmem>>, vector<32x2xbf16>
    %cst_14 = arith.constant dense<0.000000e+00> : vector<32x2xf32>
    %19 = tpu.matmul %17, %18, %cst_14 {dimension_numbers = #tpu.dot_dimension_numbers<[1], [0], [0], [1], [0, 0, 1, 1], [], []>} : vector<32x32xbf16>, vector<32x2xbf16>, vector<32x2xf32> -> vector<32x2xf32>
    %c0_15 = arith.constant 0 : index
    %c0_16 = arith.constant 0 : index
    %20 = vector.load %arg7[%c0_15, %c0_16] : memref<1x2xf32, #tpu.memory_space<vmem>>, vector<1x2xf32>
    %21 = vector.broadcast %20 : vector<1x2xf32> to vector<32x2xf32>
    %22 = arith.addf %19, %21 : vector<32x2xf32>
    %23 = math.tanh %22 : vector<32x2xf32>
    %cst_17 = arith.constant 2.000000e+00 : f32
    %24 = vector.broadcast %cst_17 : f32 to vector<32x2xf32>
    %25 = arith.mulf %24, %23 : vector<32x2xf32>
    %c0_18 = arith.constant 0 : index
    %c0_19 = arith.constant 0 : index
    %26 = vector.load %arg8[%c0_18, %c0_19] : memref<32x2xf32, #tpu.memory_space<vmem>>, vector<32x2xf32>
    tpu.vector_store %arg8[%c0_18, %c0_19], %25 {strides = array<i32>} : memref<32x2xf32, #tpu.memory_space<vmem>>, vector<32x2xf32>,
    return
  }
  func.func @transform_0(%arg0: i32) -> (i32, i32) {
    %c0_i32 = arith.constant 0 : i32
    %c0_i32_0 = arith.constant 0 : i32
    return %arg0, %c0_i32 : i32, i32
  }
  func.func @transform_1(%arg0: i32) -> (i32, i32) {
    %c0_i32 = arith.constant 0 : i32
    %c0_i32_0 = arith.constant 0 : i32
    %c0_i32_1 = arith.constant 0 : i32
    return %c0_i32, %c0_i32_0 : i32, i32
  }
  func.func @transform_2(%arg0: i32) -> (i32, i32) {
    %c0_i32 = arith.constant 0 : i32
    %c0_i32_0 = arith.constant 0 : i32
    %c0_i32_1 = arith.constant 0 : i32
    return %c0_i32, %c0_i32_0 : i32, i32
  }
  func.func @transform_3(%arg0: i32) -> (i32, i32) {
    %c0_i32 = arith.constant 0 : i32
    %c0_i32_0 = arith.constant 0 : i32
    %c0_i32_1 = arith.constant 0 : i32
    return %c0_i32, %c0_i32_0 : i32, i32
  }
  func.func @transform_4(%arg0: i32) -> (i32, i32) {
    %c0_i32 = arith.constant 0 : i32
    %c0_i32_0 = arith.constant 0 : i32
    %c0_i32_1 = arith.constant 0 : i32
    return %c0_i32, %c0_i32_0 : i32, i32
  }
  func.func @transform_5(%arg0: i32) -> (i32, i32) {
    %c0_i32 = arith.constant 0 : i32
    %c0_i32_0 = arith.constant 0 : i32
    %c0_i32_1 = arith.constant 0 : i32
    return %c0_i32, %c0_i32_0 : i32, i32
  }
  func.func @transform_6(%arg0: i32) -> (i32, i32) {
    %c0_i32 = arith.constant 0 : i32
    %c0_i32_0 = arith.constant 0 : i32
    %c0_i32_1 = arith.constant 0 : i32
    return %c0_i32, %c0_i32_0 : i32, i32
  }
  func.func @transform_7(%arg0: i32) -> (i32, i32) {
    %c0_i32 = arith.constant 0 : i32
    %c0_i32_0 = arith.constant 0 : i32
    return %arg0, %c0_i32 : i32, i32
  }
}

</mosaic_0001>

<llo_original>
// kernel: tpu_custom_call.1
$region0: #{tpu_custom_call.1}
  #allocation0 [shape = 'u32[]', space=smem, size = 0x4, offset = 0x4, fixed_abs, tag = 'smem constant byte address 0x4 - core index']
  #allocation1 [shape = 'u32[144,128]{1,0:T(1,128)}', space=vmem, size = 0x12000, scoped, tag = 'internal scratch']
  %s0 = inlined_call_operand.vmem [shape: f32[64,32], index: 0, kind: input, shape index: {}]
  %s1 = inlined_call_operand.vmem [shape: bf16[32,32], index: 1, kind: input, shape index: {}]
  %s2 = inlined_call_operand.vmem [shape: f32[1,32], index: 2, kind: input, shape index: {}]
  %s3 = inlined_call_operand.vmem [shape: bf16[32,32], index: 3, kind: input, shape index: {}]
  %s4 = inlined_call_operand.vmem [shape: f32[1,32], index: 4, kind: input, shape index: {}]
  %s5 = inlined_call_operand.vmem [shape: bf16[32,2], index: 5, kind: input, shape index: {}]
  %s6 = inlined_call_operand.vmem [shape: f32[1,2], index: 6, kind: input, shape index: {}]
  %s7 = inlined_call_operand.vmem [shape: f32[64,2], index: 7, kind: output, shape index: {}]
  %s8 = sld [smem:[#allocation0]]
  $region61: #{tpu_custom_call.1} parent=0
    _
  %s10 = ssub.s32 1, %s8
  %s11 = scalar_select 0, %s10, %s8
  loop: start=0, step=1, limit=4
  $region2: #{tpu_custom_call.1} parent=0 // loop_pre_header
    _
  $region3: #{tpu_custom_call.1} parent=0 // loop_header
    %s13 = sphi 0, %s17
    %p14 = scmp.ge.s32.totalorder %s13, 4
    %s23 = sphi 0, %s25
    %s26 = sphi 0, %s23
    %s27 = sphi 0, %s26
    %s43 = sphi 0, %s27
    %s47 = sphi 0, %s47
    %s49 = sphi 0, %s47
    %s50 = sphi 0, %s49
    %s64 = sphi 0, %s50
    %s68 = sphi 0, %s68
    %s70 = sphi 0, %s68
    %s71 = sphi 0, %s70
    %s85 = sphi 0, %s71
    %s89 = sphi 0, %s89
    %s91 = sphi 0, %s89
    %s92 = sphi 0, %s91
    %s106 = sphi 0, %s92
    %s110 = sphi 0, %s110
    %s112 = sphi 0, %s110
    %s113 = sphi 0, %s112
    %s127 = sphi 0, %s113
    %s131 = sphi 0, %s131
    %s133 = sphi 0, %s131
    %s134 = sphi 0, %s133
    %s148 = sphi 0, %s134
    %s152 = sphi 0, %s152
    %s154 = sphi 0, %s152
    %s155 = sphi 0, %s154
    %s169 = sphi 0, %s155
    %s175 = sphi 0, %s177
    %s178 = sphi 0, %s175
    %s179 = sphi 0, %s178
    %s195 = sphi 0, %s179
  $region4: #{tpu_custom_call.1} parent=0 // loop_header_branch
    %16 = sbr.rel (%p14) target = $region8
  $region5: #{tpu_custom_call.1} parent=0 // loop_body
    %s18 = ssub.s32 %s13, 1
    %s19 = ssub.s32 %s13, 2
    %s20 = sadd.s32 %s13, 1
    %s21 = ssub.s32 %s13, %s20
    %p22 = scmp.eq.s32.totalorder %s21, 0
    %s24 = sadd.s32 %s23, 1
    %s25 = scalar_select %p22, %s23, %s24
    %p28 = pneg %p22
    %p29 = scmp.eq.s32.totalorder %s13, 1
    %p30 = por %p28, %p29
    %p31 = scmp.ne.s32.totalorder %s23, %s26
    %p32 = scmp.eq.s32.totalorder %s13, 0
    %p33 = por %p31, %p32
    %p34 = scmp.ne.s32.totalorder %s23, %s26
    %p35 = scmp.eq.s32.totalorder %s18, 1
    %p36 = por %p34, %p35
    %p37 = scmp.ne.s32.totalorder %s26, %s27
    %p38 = scmp.eq.s32.totalorder %s18, 0
    %p39 = por %p37, %p38
    %p40 = scmp.ne.s32.totalorder %s26, %s27
    %p41 = scmp.eq.s32.totalorder %s19, 1
    %p42 = por %p40, %p41
    %p44 = scmp.ne.s32.totalorder %s27, %s43
    %p45 = scmp.eq.s32.totalorder %s19, 0
    %p46 = por %p44, %p45
    %s48 = sadd.s32 %s47, 1
    %p51 = scmp.eq.s32.totalorder %s13, 1
    %p52 = scmp.ne.s32.totalorder %s47, %s49
    %p53 = scmp.eq.s32.totalorder %s13, 0
    %p54 = por %p52, %p53
    %p55 = scmp.ne.s32.totalorder %s47, %s49
    %p56 = scmp.eq.s32.totalorder %s18, 1
    %p57 = por %p55, %p56
    %p58 = scmp.ne.s32.totalorder %s49, %s50
    %p59 = scmp.eq.s32.totalorder %s18, 0
    %p60 = por %p58, %p59
    %p61 = scmp.ne.s32.totalorder %s49, %s50
    %p62 = scmp.eq.s32.totalorder %s19, 1
    %p63 = por %p61, %p62
    %p65 = scmp.ne.s32.totalorder %s50, %s64
    %p66 = scmp.eq.s32.totalorder %s19, 0
    %p67 = por %p65, %p66
    %s69 = sadd.s32 %s68, 1
    %p72 = scmp.eq.s32.totalorder %s13, 1
    %p73 = scmp.ne.s32.totalorder %s68, %s70
    %p74 = scmp.eq.s32.totalorder %s13, 0
    %p75 = por %p73, %p74
    %p76 = scmp.ne.s32.totalorder %s68, %s70
    %p77 = scmp.eq.s32.totalorder %s18, 1
    %p78 = por %p76, %p77
    %p79 = scmp.ne.s32.totalorder %s70, %s71
    %p80 = scmp.eq.s32.totalorder %s18, 0
    %p81 = por %p79, %p80
    %p82 = scmp.ne.s32.totalorder %s70, %s71
    %p83 = scmp.eq.s32.totalorder %s19, 1
    %p84 = por %p82, %p83
    %p86 = scmp.ne.s32.totalorder %s71, %s85
    %p87 = scmp.eq.s32.totalorder %s19, 0
    %p88 = por %p86, %p87
    %s90 = sadd.s32 %s89, 1
    %p93 = scmp.eq.s32.totalorder %s13, 1
    %p94 = scmp.ne.s32.totalorder %s89, %s91
    %p95 = scmp.eq.s32.totalorder %s13, 0
    %p96 = por %p94, %p95
    %p97 = scmp.ne.s32.totalorder %s89, %s91
    %p98 = scmp.eq.s32.totalorder %s18, 1
    %p99 = por %p97, %p98
    %p100 = scmp.ne.s32.totalorder %s91, %s92
    %p101 = scmp.eq.s32.totalorder %s18, 0
    %p102 = por %p100, %p101
    %p103 = scmp.ne.s32.totalorder %s91, %s92
    %p104 = scmp.eq.s32.totalorder %s19, 1
    %p105 = por %p103, %p104
    %p107 = scmp.ne.s32.totalorder %s92, %s106
    %p108 = scmp.eq.s32.totalorder %s19, 0
    %p109 = por %p107, %p108
    %s111 = sadd.s32 %s110, 1
    %p114 = scmp.eq.s32.totalorder %s13, 1
    %p115 = scmp.ne.s32.totalorder %s110, %s112
    %p116 = scmp.eq.s32.totalorder %s13, 0
    %p117 = por %p115, %p116
    %p118 = scmp.ne.s32.totalorder %s110, %s112
    %p119 = scmp.eq.s32.totalorder %s18, 1
    %p120 = por %p118, %p119
    %p121 = scmp.ne.s32.totalorder %s112, %s113
    %p122 = scmp.eq.s32.totalorder %s18, 0
    %p123 = por %p121, %p122
    %p124 = scmp.ne.s32.totalorder %s112, %s113
    %p125 = scmp.eq.s32.totalorder %s19, 1
    %p126 = por %p124, %p125
    %p128 = scmp.ne.s32.totalorder %s113, %s127
    %p129 = scmp.eq.s32.totalorder %s19, 0
    %p130 = por %p128, %p129
    %s132 = sadd.s32 %s131, 1
    %p135 = scmp.eq.s32.totalorder %s13, 1
    %p136 = scmp.ne.s32.totalorder %s131, %s133
    %p137 = scmp.eq.s32.totalorder %s13, 0
    %p138 = por %p136, %p137
    %p139 = scmp.ne.s32.totalorder %s131, %s133
    %p140 = scmp.eq.s32.totalorder %s18, 1
    %p141 = por %p139, %p140
    %p142 = scmp.ne.s32.totalorder %s133, %s134
    %p143 = scmp.eq.s32.totalorder %s18, 0
    %p144 = por %p142, %p143
    %p145 = scmp.ne.s32.totalorder %s133, %s134
    %p146 = scmp.eq.s32.totalorder %s19, 1
    %p147 = por %p145, %p146
    %p149 = scmp.ne.s32.totalorder %s134, %s148
    %p150 = scmp.eq.s32.totalorder %s19, 0
    %p151 = por %p149, %p150
    %s153 = sadd.s32 %s152, 1
    %p156 = scmp.eq.s32.totalorder %s13, 1
    %p157 = scmp.ne.s32.totalorder %s152, %s154
    %p158 = scmp.eq.s32.totalorder %s13, 0
    %p159 = por %p157, %p158
    %p160 = scmp.ne.s32.totalorder %s152, %s154
    %p161 = scmp.eq.s32.totalorder %s18, 1
    %p162 = por %p160, %p161
    %p163 = scmp.ne.s32.totalorder %s154, %s155
    %p164 = scmp.eq.s32.totalorder %s18, 0
    %p165 = por %p163, %p164
    %p166 = scmp.ne.s32.totalorder %s154, %s155
    %p167 = scmp.eq.s32.totalorder %s19, 1
    %p168 = por %p166, %p167
    %p170 = scmp.ne.s32.totalorder %s155, %s169
    %p171 = scmp.eq.s32.totalorder %s19, 0
    %p172 = por %p170, %p171
    %s173 = ssub.s32 %s13, %s20
    %p174 = scmp.eq.s32.totalorder %s173, 0
    %s176 = sadd.s32 %s175, 1
    %s177 = scalar_select %p174, %s175, %s176
    %p180 = pneg %p174
    %p181 = scmp.eq.s32.totalorder %s13, 1
    %p182 = por %p180, %p181
    %p183 = scmp.ne.s32.totalorder %s175, %s178
    %p184 = scmp.eq.s32.totalorder %s13, 0
    %p185 = por %p183, %p184
    %p186 = scmp.ne.s32.totalorder %s175, %s178
    %p187 = scmp.eq.s32.totalorder %s18, 1
    %p188 = por %p186, %p187
    %p189 = scmp.ne.s32.totalorder %s178, %s179
    %p190 = scmp.eq.s32.totalorder %s18, 0
    %p191 = por %p189, %p190
    %p192 = scmp.ne.s32.totalorder %s178, %s179
    %p193 = scmp.eq.s32.totalorder %s19, 1
    %p194 = por %p192, %p193
    %p196 = scmp.ne.s32.totalorder %s179, %s195
    %p197 = scmp.eq.s32.totalorder %s19, 0
    %p198 = por %p196, %p197
    %p199 = scmp.le.s32.totalorder 1, %s13
    %p200 = scmp.lt.s32.totalorder %s13, 3
    %p201 = pnand %p199, %p200
    %p202 = pneg %p201
    // Predicated region
    $region9: #{tpu_custom_call.1} parent=5 // pred_check
      _
    $region10: #{tpu_custom_call.1} parent=5 // pred_check_branch
      %204 = sbr.rel (%p201) target = $region12
    $region11: #{tpu_custom_call.1} parent=5 // pred_region
      %s205 = ssub.s32 %s13, 1
      // Predicated region
      $region13: #{tpu_custom_call.1} parent=11 // pred_check
        %p206 = pneg %p60
      $region14: #{tpu_custom_call.1} parent=11 // pred_check_branch
        %208 = sbr.rel (%p206) target = $region16
      $region15: #{tpu_custom_call.1} parent=11 // pred_region
        _
      $region16: #{tpu_custom_call.1} parent=11 // pred_fallthru
        _
      // Predicated region
      $region17: #{tpu_custom_call.1} parent=11 // pred_check
        %p209 = pneg %p81
      $region18: #{tpu_custom_call.1} parent=11 // pred_check_branch
        %211 = sbr.rel (%p209) target = $region20
      $region19: #{tpu_custom_call.1} parent=11 // pred_region
        _
      $region20: #{tpu_custom_call.1} parent=11 // pred_fallthru
        _
      // Predicated region
      $region21: #{tpu_custom_call.1} parent=11 // pred_check
        %p212 = pneg %p102
      $region22: #{tpu_custom_call.1} parent=11 // pred_check_branch
        %214 = sbr.rel (%p212) target = $region24
      $region23: #{tpu_custom_call.1} parent=11 // pred_region
        _
      $region24: #{tpu_custom_call.1} parent=11 // pred_fallthru
        _
      // Predicated region
      $region25: #{tpu_custom_call.1} parent=11 // pred_check
        %p215 = pneg %p123
      $region26: #{tpu_custom_call.1} parent=11 // pred_check_branch
        %217 = sbr.rel (%p215) target = $region28
      $region27: #{tpu_custom_call.1} parent=11 // pred_region
        _
      $region28: #{tpu_custom_call.1} parent=11 // pred_fallthru
        _
      // Predicated region
      $region29: #{tpu_custom_call.1} parent=11 // pred_check
        %p218 = pneg %p144
      $region30: #{tpu_custom_call.1} parent=11 // pred_check_branch
        %220 = sbr.rel (%p218) target = $region32
      $region31: #{tpu_custom_call.1} parent=11 // pred_region
        _
      $region32: #{tpu_custom_call.1} parent=11 // pred_fallthru
        _
      // Predicated region
      $region33: #{tpu_custom_call.1} parent=11 // pred_check
        %p221 = pneg %p165
      $region34: #{tpu_custom_call.1} parent=11 // pred_check_branch
        %223 = sbr.rel (%p221) target = $region36
      $region35: #{tpu_custom_call.1} parent=11 // pred_region
        _
      $region36: #{tpu_custom_call.1} parent=11 // pred_fallthru
        _
    $region12: #{tpu_custom_call.1} parent=5 // pred_fallthru
      _
    %p224 = scmp.lt.s32.totalorder %s13, 2
    // Predicated region
    $region37: #{tpu_custom_call.1} parent=5 // pred_check
      %p225 = pneg %p224
    $region38: #{tpu_custom_call.1} parent=5 // pred_check_branch
      %227 = sbr.rel (%p225) target = $region40
    $region39: #{tpu_custom_call.1} parent=5 // pred_region
      // Predicated region
      $region41: #{tpu_custom_call.1} parent=39 // pred_check
        %p228 = pneg %p33
      $region42: #{tpu_custom_call.1} parent=39 // pred_check_branch
        %230 = sbr.rel (%p228) target = $region44
      $region43: #{tpu_custom_call.1} parent=39 // pred_region
        %s231 = smul.u32 4, %s13
        %p232 = scmp.lt.s32.totalorder %s231, 7
        %s233 = scalar_select %p232, %s231, 7
        %s234 = smul.addr %s233, 8
        %s235 = scalar_lea.vmem %s0, %s234
        %s236 = smul.u32 4, %s13
      $region44: #{tpu_custom_call.1} parent=39 // pred_fallthru
        _
    $region40: #{tpu_custom_call.1} parent=5 // pred_fallthru
      _
    %p237 = scmp.le.s32.totalorder 1, %s13
    %p238 = scmp.lt.s32.totalorder %s13, 3
    %p239 = pnand %p237, %p238
    %p240 = pneg %p239
    // Predicated region
    $region45: #{tpu_custom_call.1} parent=5 // pred_check
      _
    $region46: #{tpu_custom_call.1} parent=5 // pred_check_branch
      %242 = sbr.rel (%p239) target = $region48
    $region47: #{tpu_custom_call.1} parent=5 // pred_region
      %s243 = ssub.s32 %s13, 1
      %s244 = smul.u32 4, %s18
      %p245 = scmp.lt.s32.totalorder %s244, 7
      %s246 = scalar_select %p245, %s244, 7
      %s247 = smul.addr %s246, 8
      %s248 = scalar_lea.vmem %s0, %s247
      %p249 = pneg %p39
      %p250 = pneg %p36
      %p251 = pneg %p60
      %p252 = pneg %p57
      %p253 = pneg %p81
      %p254 = pneg %p78
      %p255 = pneg %p102
      %p256 = pneg %p99
      %p257 = pneg %p123
      %p258 = pneg %p120
      %p259 = pneg %p144
      %p260 = pneg %p141
      %p261 = pneg %p165
      %p262 = pneg %p162
      %p263 = pneg %p191
      %p264 = pneg %p188
      %s265 = smul.u32 4, %s18
      %p266 = scmp.lt.s32.totalorder %s265, 7
      %s267 = scalar_select %p266, %s265, 7
      %s268 = smul.addr %s267, 8
      %s269 = scalar_lea.vmem %s7, %s268
      %s270 = smul.u32 4, %s18
      %p271 = scmp.lt.s32.totalorder %s270, 7
      %s272 = scalar_select %p271, %s270, 7
      %s273 = smul.addr %s272, 8
      %s274 = scalar_lea.vmem %s0, %s273
      %s275 = smul.u32 4, %s18
      %s276 = smul.u32 4, %s18
      %p277 = scmp.lt.s32.totalorder %s276, 7
      %s278 = scalar_select %p277, %s276, 7
      %s279 = smul.addr %s278, 8
      %s280 = scalar_lea.vmem %s7, %s279
      %s281 = smul.u32 4, %s18
      %v283 = vld [vmem:[%s274] sm:$0xff]
      %v284 = vld [vmem:[%s274 + $0x8] sm:$0xff]
      %v285 = vld [vmem:[%s274 + $0x10] sm:$0xff]
      %v286 = vld [vmem:[%s274 + $0x18] sm:$0xff]
      %v287 = vpack.c.bf16 %v284, %v283
      %v288 = vpack.c.bf16 %v286, %v285
      %v289 = vld [vmem:[%s1] sm:$0xf]
      %v290 = vld [vmem:[%s1 + $0x4] sm:$0xf]
      %v291 = vld [vmem:[%s1 + $0x8] sm:$0xf]
      %v292 = vld [vmem:[%s1 + $0xc] sm:$0xf]
      %v293 = vld [vmem:[%s2] sm:$0x1]
      %v295 = vlaneseq
      %v296 = vshrl.u32 %v295, 7
      %v297 = vsub.s32 0, %v296
      %v298 = vrot.slane %v293, %v297
      %v304 = vunpack.c.l.b16 %v289
      %v305 = vunpack.c.l.b16 %v290
      %v306 = vunpack.c.l.b16 %v291
      %v307 = vunpack.c.l.b16 %v292
      %v308 = vpack.c.b16 %v305, %v304
      %v309 = vpack.c.b16 %v307, %v306
      %vm312 = vcmask 261120
      %v314 = vsel %vm312, %v287, 0
      %v317 = vsel %vm312, %v288, 0
      %319 = vmatprep.subr.bf16.mxu0 0
      %320 = vmatpush1.bf16.msra.mxu0 %v308
      %321 = vmatprep.subr.bf16.mxu0 0
      %322 = vmatpush1.bf16.msra.mxu0 %v309
      %323 = vmatprep.subr.bf16.mxu0 0
      %324 = vmatpush1.bf16.msra.mxu0 0
      %325 = vmatprep.subr.bf16.mxu0 0
      %326 = vmatpush1.bf16.msra.mxu0 0
      %327 = vmatprep.subr.bf16.mxu0 0
      %328 = vmatpush1.bf16.msra.mxu0 0
      %329 = vmatprep.subr.bf16.mxu0 0
      %330 = vmatpush1.bf16.msra.mxu0 0
      %331 = vmatprep.subr.bf16.mxu0 0
      %332 = vmatpush1.bf16.msra.mxu0 0
      %333 = vmatprep.subr.bf16.mxu0 0
      %334 = vmatpush1.bf16.msra.mxu0 0
      %335 = vmatprep.subr.bf16.mxu0 0
      %336 = vmatpush1.bf16.msra.mxu0 0
      %337 = vmatprep.subr.bf16.mxu0 0
      %338 = vmatpush1.bf16.msra.mxu0 0
      %339 = vmatprep.subr.bf16.mxu0 0
      %340 = vmatpush1.bf16.msra.mxu0 0
      %341 = vmatprep.subr.bf16.mxu0 0
      %342 = vmatpush1.bf16.msra.mxu0 0
      %343 = vmatprep.subr.bf16.mxu0 0
      %344 = vmatpush1.bf16.msra.mxu0 0
      %345 = vmatprep.subr.bf16.mxu0 0
      %346 = vmatpush1.bf16.msra.mxu0 0
      %347 = vmatprep.subr.bf16.mxu0 0
      %348 = vmatpush1.bf16.msra.mxu0 0
      %349 = vmatprep.subr.bf16.mxu0 0
      %350 = vmatpush1.bf16.msra.mxu0 0
      %351 = vmatprep.mubr.bf16.mxu0 0
      %352 = vmatmul.mubr.bf16.gmra.mrb[0].mxu0 %v314
      %v353 = vpop.f32.mrb[0].mxu0
      %v354 = vadd.f32 %v298, %v353
      %v355 = vpop.f32.mrb[0].mxu0
      %v356 = vpop.f32.mrb[0].mxu0
      %v357 = vadd.f32 %v298, %v356
      %v358 = vpop.f32.mrb[0].mxu0
      %359 = vmatprep.mubr.bf16.mxu0 0
      %360 = vmatmul.mubr.bf16.gmra.mrb[0].mxu0 %v317
      %v361 = vpop.f32.mrb[0].mxu0
      %v362 = vadd.f32 %v298, %v361
      %v363 = vpop.f32.mrb[0].mxu0
      %v364 = vpop.f32.mrb[0].mxu0
      %v365 = vadd.f32 %v298, %v364
      %v366 = vpop.f32.mrb[0].mxu0
      %367 = vdwg.mxu0
      %v368 = vmax.f32 %v354, 0.0
      %v369 = vmax.f32 %v357, 0.0
      %v370 = vmax.f32 %v362, 0.0
      %v371 = vmax.f32 %v365, 0.0
      %v372 = vpack.c.bf16 %v369, %v368
      %v373 = vpack.c.bf16 %v371, %v370
      %v374 = vld [vmem:[%s3] sm:$0xf]
      %v375 = vld [vmem:[%s3 + $0x4] sm:$0xf]
      %v376 = vld [vmem:[%s3 + $0x8] sm:$0xf]
      %v377 = vld [vmem:[%s3 + $0xc] sm:$0xf]
      %v378 = vld [vmem:[%s4] sm:$0x1]
      %v380 = vlaneseq
      %v381 = vshrl.u32 %v380, 7
      %v382 = vsub.s32 0, %v381
      %v383 = vrot.slane %v378, %v382
      %v389 = vunpack.c.l.b16 %v374
      %v390 = vunpack.c.l.b16 %v375
      %v391 = vunpack.c.l.b16 %v376
      %v392 = vunpack.c.l.b16 %v377
      %v393 = vpack.c.b16 %v390, %v389
      %v394 = vpack.c.b16 %v392, %v391
      %v398 = vsel %vm312, %v372, 0
      %v401 = vsel %vm312, %v373, 0
      %403 = vmatprep.subr.bf16.mxu0 0
      %404 = vmatpush1.bf16.msra.mxu0 %v393
      %405 = vmatprep.subr.bf16.mxu0 0
      %406 = vmatpush1.bf16.msra.mxu0 %v394
      %407 = vmatprep.subr.bf16.mxu0 0
      %408 = vmatpush1.bf16.msra.mxu0 0
      %409 = vmatprep.subr.bf16.mxu0 0
      %410 = vmatpush1.bf16.msra.mxu0 0
      %411 = vmatprep.subr.bf16.mxu0 0
      %412 = vmatpush1.bf16.msra.mxu0 0
      %413 = vmatprep.subr.bf16.mxu0 0
      %414 = vmatpush1.bf16.msra.mxu0 0
      %415 = vmatprep.subr.bf16.mxu0 0
      %416 = vmatpush1.bf16.msra.mxu0 0
      %417 = vmatprep.subr.bf16.mxu0 0
      %418 = vmatpush1.bf16.msra.mxu0 0
      %419 = vmatprep.subr.bf16.mxu0 0
      %420 = vmatpush1.bf16.msra.mxu0 0
      %421 = vmatprep.subr.bf16.mxu0 0
      %422 = vmatpush1.bf16.msra.mxu0 0
      %423 = vmatprep.subr.bf16.mxu0 0
      %424 = vmatpush1.bf16.msra.mxu0 0
      %425 = vmatprep.subr.bf16.mxu0 0
      %426 = vmatpush1.bf16.msra.mxu0 0
      %427 = vmatprep.subr.bf16.mxu0 0
      %428 = vmatpush1.bf16.msra.mxu0 0
      %429 = vmatprep.subr.bf16.mxu0 0
      %430 = vmatpush1.bf16.msra.mxu0 0
      %431 = vmatprep.subr.bf16.mxu0 0
      %432 = vmatpush1.bf16.msra.mxu0 0
      %433 = vmatprep.subr.bf16.mxu0 0
      %434 = vmatpush1.bf16.msra.mxu0 0
      %435 = vmatprep.mubr.bf16.mxu0 0
      %436 = vmatmul.mubr.bf16.gmra.mrb[0].mxu0 %v398
      %v437 = vpop.f32.mrb[0].mxu0
      %v438 = vadd.f32 %v383, %v437
      %v439 = vpop.f32.mrb[0].mxu0
      %v440 = vpop.f32.mrb[0].mxu0
      %v441 = vadd.f32 %v383, %v440
      %v442 = vpop.f32.mrb[0].mxu0
      %443 = vmatprep.mubr.bf16.mxu0 0
      %444 = vmatmul.mubr.bf16.gmra.mrb[0].mxu0 %v401
      %v445 = vpop.f32.mrb[0].mxu0
      %v446 = vadd.f32 %v383, %v445
      %v447 = vpop.f32.mrb[0].mxu0
      %v448 = vpop.f32.mrb[0].mxu0
      %v449 = vadd.f32 %v383, %v448
      %v450 = vpop.f32.mrb[0].mxu0
      %451 = vdwg.mxu0
      %v452 = vmax.f32 %v438, 0.0
      %v453 = vmax.f32 %v441, 0.0
      %v454 = vmax.f32 %v446, 0.0
      %v455 = vmax.f32 %v449, 0.0
      %v456 = vpack.c.bf16 %v453, %v452
      %v457 = vpack.c.bf16 %v455, %v454
      %v458 = vld [vmem:[%s5] sm:$0xf]
      %v459 = vld [vmem:[%s5 + $0x4] sm:$0xf]
      %v460 = vld [vmem:[%s5 + $0x8] sm:$0xf]
      %v461 = vld [vmem:[%s5 + $0xc] sm:$0xf]
      %v462 = vld [vmem:[%s6] sm:$0x1]
      %v464 = vlaneseq
      %v465 = vshrl.u32 %v464, 7
      %v466 = vsub.s32 0, %v465
      %v467 = vrot.slane %v462, %v466
      %v473 = vunpack.c.l.b16 %v458
      %v474 = vunpack.c.l.b16 %v459
      %v475 = vunpack.c.l.b16 %v460
      %v476 = vunpack.c.l.b16 %v461
      %v477 = vpack.c.b16 %v474, %v473
      %v478 = vpack.c.b16 %v476, %v475
      %v482 = vsel %vm312, %v456, 0
      %v485 = vsel %vm312, %v457, 0
      %487 = vmatprep.subr.bf16.mxu0 0
      %488 = vmatpush1.bf16.msra.mxu0 %v477
      %489 = vmatprep.subr.bf16.mxu0 0
      %490 = vmatpush1.bf16.msra.mxu0 %v478
      %491 = vmatprep.subr.bf16.mxu0 0
      %492 = vmatpush1.bf16.msra.mxu0 0
      %493 = vmatprep.subr.bf16.mxu0 0
      %494 = vmatpush1.bf16.msra.mxu0 0
      %495 = vmatprep.subr.bf16.mxu0 0
      %496 = vmatpush1.bf16.msra.mxu0 0
      %497 = vmatprep.subr.bf16.mxu0 0
      %498 = vmatpush1.bf16.msra.mxu0 0
      %499 = vmatprep.subr.bf16.mxu0 0
      %500 = vmatpush1.bf16.msra.mxu0 0
      %501 = vmatprep.subr.bf16.mxu0 0
      %502 = vmatpush1.bf16.msra.mxu0 0
      %503 = vmatprep.subr.bf16.mxu0 0
      %504 = vmatpush1.bf16.msra.mxu0 0
      %505 = vmatprep.subr.bf16.mxu0 0
      %506 = vmatpush1.bf16.msra.mxu0 0
      %507 = vmatprep.subr.bf16.mxu0 0
      %508 = vmatpush1.bf16.msra.mxu0 0
      %509 = vmatprep.subr.bf16.mxu0 0
      %510 = vmatpush1.bf16.msra.mxu0 0
      %511 = vmatprep.subr.bf16.mxu0 0
      %512 = vmatpush1.bf16.msra.mxu0 0
      %513 = vmatprep.subr.bf16.mxu0 0
      %514 = vmatpush1.bf16.msra.mxu0 0
      %515 = vmatprep.subr.bf16.mxu0 0
      %516 = vmatpush1.bf16.msra.mxu0 0
      %517 = vmatprep.subr.bf16.mxu0 0
      %518 = vmatpush1.bf16.msra.mxu0 0
      %519 = vmatprep.mubr.bf16.mxu0 0
      %520 = vmatmul.mubr.bf16.gmra.mrb[0].mxu0 %v482
      %v521 = vpop.f32.mrb[0].mxu0
      %v522 = vadd.f32 %v467, %v521
      %v523 = vpop.f32.mrb[0].mxu0
      %v524 = vpop.f32.mrb[0].mxu0
      %v525 = vadd.f32 %v467, %v524
      %v526 = vpop.f32.mrb[0].mxu0
      %527 = vmatprep.mubr.bf16.mxu0 0
      %528 = vmatmul.mubr.bf16.gmra.mrb[0].mxu0 %v485
      %v529 = vpop.f32.mrb[0].mxu0
      %v530 = vadd.f32 %v467, %v529
      %v531 = vpop.f32.mrb[0].mxu0
      %v532 = vpop.f32.mrb[0].mxu0
      %v533 = vadd.f32 %v467, %v532
      %v534 = vpop.f32.mrb[0].mxu0
      %535 = vdwg.mxu0
      %v536 = vtanh.pop %v522
      %v537 = vtanh.pop %v525
      %v538 = vtanh.pop %v530
      %v539 = vtanh.pop %v533
      %v540 = vmul.f32 %v536, 2.0
      %v541 = vmul.f32 %v537, 2.0
      %v542 = vmul.f32 %v538, 2.0
      %v543 = vmul.f32 %v539, 2.0
      %vm544 = vcmask 15360
      %545 = vst.msk [vmem:[%s280] sm:$0xff] %vm544, %v540
      %546 = vst.msk [vmem:[%s280 + $0x8] sm:$0xff] %vm544, %v541
      %547 = vst.msk [vmem:[%s280 + $0x10] sm:$0xff] %vm544, %v542
      %548 = vst.msk [vmem:[%s280 + $0x18] sm:$0xff] %vm544, %v543
      %s549 = smul.u32 4, %s18
      %p550 = scmp.lt.s32.totalorder %s549, 7
      %s551 = scalar_select %p550, %s549, 7
      %s552 = smul.addr %s551, 8
      %s553 = scalar_lea.vmem %s7, %s552
      // Predicated region
      $region49: #{tpu_custom_call.1} parent=47 // pred_check
        %p554 = pneg %p188
      $region50: #{tpu_custom_call.1} parent=47 // pred_check_branch
        %556 = sbr.rel (%p554) target = $region52
      $region51: #{tpu_custom_call.1} parent=47 // pred_region
        %s557 = smul.u32 4, %s18
      $region52: #{tpu_custom_call.1} parent=47 // pred_fallthru
        _
    $region48: #{tpu_custom_call.1} parent=5 // pred_fallthru
      _
    %p558 = scmp.le.s32.totalorder 2, %s13
    // Predicated region
    $region53: #{tpu_custom_call.1} parent=5 // pred_check
      %p559 = pneg %p558
    $region54: #{tpu_custom_call.1} parent=5 // pred_check_branch
      %561 = sbr.rel (%p559) target = $region56
    $region55: #{tpu_custom_call.1} parent=5 // pred_region
      %s562 = ssub.s32 %s13, 2
      // Predicated region
      $region57: #{tpu_custom_call.1} parent=55 // pred_check
        %p563 = pneg %p194
      $region58: #{tpu_custom_call.1} parent=55 // pred_check_branch
        %565 = sbr.rel (%p563) target = $region60
      $region59: #{tpu_custom_call.1} parent=55 // pred_region
        %s566 = smul.u32 4, %s19
        %p567 = scmp.lt.s32.totalorder %s566, 7
        %s568 = scalar_select %p567, %s566, 7
        %s569 = smul.addr %s568, 8
        %s570 = scalar_lea.vmem %s7, %s569
      $region60: #{tpu_custom_call.1} parent=55 // pred_fallthru
        _
    $region56: #{tpu_custom_call.1} parent=5 // pred_fallthru
      _
  $region6: #{tpu_custom_call.1} parent=0 // loop_footer
    %s17 = sadd.s32 1, %s13
  $region7: #{tpu_custom_call.1} parent=0 // loop_footer_branch
    %12 = sbr.rel target = $region3
  $region8: #{tpu_custom_call.1} parent=0 // loop_exit
    _

</llo_original>
